<compile_context>
chip_gen: v6e
topology: v6e:2x2x1
jax: 0.10.0
libtpu: 0.0.40
codegen_flags: <defaults>
</compile_context>

<pallas_src>
import functools

import jax
import jax.numpy as jnp
from jax.experimental import pallas as pl
from jax.experimental.pallas import tpu as pltpu


# ----------------------------------------------------------------------------
# Pallas kernel
# ----------------------------------------------------------------------------
def _pool2x2_kernel(x_ref, s_ref, o_ref, *, op, w2):
    # x_ref: (tg, L)            packed rows, L = G * 2 * w2, w2 = one image row
    # s_ref: (L - w2 - 1, Dout) constant compaction matrix (1 nonzero / column)
    # o_ref: (tg, Dout)         Dout = G * Wo output pixels per packed row
    v = x_ref[...].astype(jnp.float32)          # f32 compute (v5e-safe)
    L = v.shape[-1]
    comb = jnp.maximum if op == "MP" else jnp.add
    # vertical 2 -> 1: the partner image row sits w2 lanes to the right
    r = comb(v[:, : L - w2], v[:, w2:])
    # horizontal 2 -> 1: the right column neighbour is the next lane
    c = comb(r[:, :-1], r[:, 1:])
    # compact the Dout valid lanes (exact 0/1 (or 0.25) selection, idle MXU)
    out = jnp.dot(c, s_ref[...], preferred_element_type=jnp.float32)
    o_ref[...] = out.astype(o_ref.dtype)


# ----------------------------------------------------------------------------
# Wrapper
# ----------------------------------------------------------------------------
@functools.partial(jax.jit, static_argnames=("op",))
def _pool2x2(x, op):
    N, C, H, W = x.shape
    Ho, Wo = H // 2, W // 2
    if N * C * Ho * Wo == 0:
        return jnp.zeros((N, C, Ho, Wo), x.dtype)
    if H != 2 * Ho or W != 2 * Wo:              # floor mode: drop trailing row/col
        x = x[:, :, : 2 * Ho, : 2 * Wo]
    W2 = 2 * Wo                                 # elements in one (cropped) image row
    M = N * C * Ho                              # total output rows

    # --- pack G output rows per kernel row so loads & stores are lane-dense ---
    G = 1 if Wo >= 128 else pl.cdiv(128, Wo)
    Dout = G * Wo                               # output lanes per kernel row
    L = 2 * G * W2                              # input lanes per kernel row
    Mg = pl.cdiv(M, G)                          # packed rows

    # --- fixed power-of-two row tile sized from a ~1 MiB/block VMEM budget ---
    tg = max(8, min(2048, (1 << 20) // (L * 4)))
    tg = 1 << (tg.bit_length() - 1)             # power of two (never tg = M)
    tg = min(tg, pl.next_power_of_2(Mg))
    Mg_pad = pl.cdiv(Mg, tg) * tg
    M_pad = Mg_pad * G

    x2 = x.reshape(M, W2 * 2)                   # free reshape: one row pair per row
    if M_pad != M:                              # pad rows only when needed
        x2 = jnp.pad(x2, ((0, M_pad - M), (0, 0)))
    xg = x2.reshape(Mg_pad, L)                  # free reshape: G packed row pairs

    # constant compaction matrix: column g*Wo+jo selects lane g*2*W2 + 2*jo
    Lc = L - W2 - 1
    src = (jnp.arange(G)[:, None] * (2 * W2)
           + 2 * jnp.arange(Wo)[None, :]).reshape(-1)
    scale = 1.0 if op == "MP" else 0.25
    ssel = jnp.zeros((Lc, Dout), jnp.float32).at[src, jnp.arange(Dout)].set(scale)

    # TODO(synk): for very wide images (Wo >~ 512) add a second grid axis over
    # output-column chunks so the compaction matrix stays small.

    out = pl.pallas_call(
        functools.partial(_pool2x2_kernel, op=op, w2=W2),
        out_shape=jax.ShapeDtypeStruct((Mg_pad, Dout), x.dtype),
        grid=(Mg_pad // tg,),
        in_specs=[
            pl.BlockSpec((tg, L), lambda i: (i, 0)),     # pipelined row tiles
            pl.BlockSpec((Lc, Dout), lambda i: (0, 0)),  # resident compaction matrix
        ],
        out_specs=pl.BlockSpec((tg, Dout), lambda i: (i, 0)),
        compiler_params=pltpu.CompilerParams(
            dimension_semantics=("parallel",),           # megacore-shardable rows
            vmem_limit_bytes=32 * 1024 * 1024,
        ),
    )(xg, ssel)

    return out.reshape(M_pad, Wo)[:M].reshape(N, C, Ho, Wo)


# ----------------------------------------------------------------------------
# Module (JAX / Pallas equivalent of the PyTorch DownSample)
# ----------------------------------------------------------------------------
class DownSample:
    def __init__(self, ds_type="MP"):
        if ds_type not in ("MP", "AP"):
            raise ValueError("ds_type must be 'MP' (MaxPool2d) or 'AP' (AvgPool2d)")
        self.ds_type = ds_type

    def __call__(self, x):
        return _pool2x2(x, op=self.ds_type)


# ----------------------------------------------------------------------------
# Plain-JAX reference (for correctness checking)
# ----------------------------------------------------------------------------
def _ref_downsample(x, mode):
    N, C, H, W = x.shape
    Ho, Wo = H // 2, W // 2
    xc = x[:, :, : 2 * Ho, : 2 * Wo].astype(jnp.float32)
    xc = xc.reshape(N, C, Ho, 2, Wo, 2)
    out = xc.max(axis=(3, 5)) if mode == "MP" else xc.mean(axis=(3, 5))
    return out.astype(x.dtype)


if __name__ == "__main__":
    key = jax.random.PRNGKey(0)
    x = jax.random.normal(key, (2, 4, 16, 16), jnp.float32)

    for mode in ("MP", "AP"):
        blk = DownSample(mode)
        y = jax.block_until_ready(blk(x))
        assert y.shape == (2, 4, 8, 8)
        ref = _ref_downsample(x, mode)
        err = float(jnp.max(jnp.abs(y - ref)))
        assert jnp.allclose(y, ref, atol=2e-4, rtol=2e-4), (mode, err)

    # Odd spatial extent (floor-mode crop) + row-padding / remainder path.
    x_odd = jax.random.normal(jax.random.PRNGKey(0), (2, 3, 17, 16), jnp.float32)
    for mode in ("MP", "AP"):
        y = jax.block_until_ready(DownSample(mode)(x_odd))
        assert y.shape == (2, 3, 8, 8)
        ref = _ref_downsample(x_odd, mode)
        assert jnp.allclose(y, ref, atol=2e-4, rtol=2e-4), mode

    print("KERNEL_OK")
</pallas_src>

<mosaic_0001>
module attributes {stable_mosaic.version = 11 : i64} {
  func.func @_pool2x2_kernel(%arg0: i32, %arg1: memref<4x512xf32, #tpu.memory_space<vmem>>, %arg2: memref<495x128xf32, #tpu.memory_space<vmem>>, %arg3: memref<4x128xf32, #tpu.memory_space<vmem>>) attributes {dimension_semantics = [#tpu.dimension_semantics<parallel>], iteration_bounds = array<i64: 1>, scalar_prefetch = 0 : i64, scratch_operands = 0 : i64, tpu.core_type = #tpu.core_type<tc>, window_params = [{transform_indices = @transform_0, window_bounds = array<i64: 4, 512>}, {pipeline_mode = #tpu.pipeline_mode<synchronous>, transform_indices = @transform_1, window_bounds = array<i64: 495, 128>}, {transform_indices = @transform_2, window_bounds = array<i64: 4, 128>}]} {
    %c0 = arith.constant 0 : index
    %c0_0 = arith.constant 0 : index
    %0 = vector.load %arg1[%c0, %c0_0] : memref<4x512xf32, #tpu.memory_space<vmem>>, vector<4x512xf32>
    %1 = vector.extract_strided_slice %0 {offsets = [0, 0], sizes = [4, 496], strides = [1, 1]} : vector<4x512xf32> to vector<4x496xf32>
    %2 = vector.extract_strided_slice %0 {offsets = [0, 16], sizes = [4, 496], strides = [1, 1]} : vector<4x512xf32> to vector<4x496xf32>
    %3 = arith.maximumf %1, %2 : vector<4x496xf32>
    %4 = vector.extract_strided_slice %3 {offsets = [0, 0], sizes = [4, 495], strides = [1, 1]} : vector<4x496xf32> to vector<4x495xf32>
    %5 = vector.extract_strided_slice %3 {offsets = [0, 1], sizes = [4, 495], strides = [1, 1]} : vector<4x496xf32> to vector<4x495xf32>
    %6 = arith.maximumf %4, %5 : vector<4x495xf32>
    %c0_1 = arith.constant 0 : index
    %c0_2 = arith.constant 0 : index
    %7 = vector.load %arg2[%c0_1, %c0_2] : memref<495x128xf32, #tpu.memory_space<vmem>>, vector<495x128xf32>
    %cst = arith.constant dense<0.000000e+00> : vector<4x128xf32>
    %8 = tpu.matmul %6, %7, %cst {dimension_numbers = #tpu.dot_dimension_numbers<[1], [0], [0], [1], [0, 0, 1, 1], [], []>} : vector<4x495xf32>, vector<495x128xf32>, vector<4x128xf32> -> vector<4x128xf32>
    %c0_3 = arith.constant 0 : index
    %c0_4 = arith.constant 0 : index
    %9 = vector.load %arg3[%c0_3, %c0_4] : memref<4x128xf32, #tpu.memory_space<vmem>>, vector<4x128xf32>
    tpu.vector_store %arg3[%c0_3, %c0_4], %8 {strides = array<i32>} : memref<4x128xf32, #tpu.memory_space<vmem>>, vector<4x128xf32>,
    return
  }
  func.func @transform_0(%arg0: i32) -> (i32, i32) {
    %c0_i32 = arith.constant 0 : i32
    %c0_i32_0 = arith.constant 0 : i32
    return %arg0, %c0_i32 : i32, i32
  }
  func.func @transform_1(%arg0: i32) -> (i32, i32) {
    %c0_i32 = arith.constant 0 : i32
    %c0_i32_0 = arith.constant 0 : i32
    %c0_i32_1 = arith.constant 0 : i32
    return %c0_i32, %c0_i32_0 : i32, i32
  }
  func.func @transform_2(%arg0: i32) -> (i32, i32) {
    %c0_i32 = arith.constant 0 : i32
    %c0_i32_0 = arith.constant 0 : i32
    return %arg0, %c0_i32 : i32, i32
  }
}

</mosaic_0001>

<llo_original>
// kernel: _pool2x2.1
$region0: #{_pool2x2.1}
  #allocation0 [shape = 'u32[]', space=smem, size = 0x4, offset = 0x4, fixed_abs, tag = 'smem constant byte address 0x4 - core index']
  #allocation1 [shape = 'u32[144,128]{1,0:T(1,128)}', space=vmem, size = 0x12000, scoped, tag = 'internal scratch']
  %s0 = inlined_call_operand.vmem [shape: f32[4,512], index: 0, kind: input, shape index: {}]
  %s1 = inlined_call_operand.vmem [shape: f32[495,128], index: 1, kind: input, shape index: {}]
  %s2 = inlined_call_operand.vmem [shape: f32[4,128], index: 2, kind: output, shape index: {}]
  %s3 = sld [smem:[#allocation0]]
  $region18: #{_pool2x2.1} parent=0
    _
  %s5 = ssub.s32 1, %s3
  %s6 = scalar_select 0, %s5, %s3
  // Predicated region
  $region2: #{_pool2x2.1} parent=0 // pred_check
    _
  $region3: #{_pool2x2.1} parent=0 // pred_check_branch
    %8 = sbr.rel (0) target = $region5
  $region4: #{_pool2x2.1} parent=0 // pred_region
    _
  $region5: #{_pool2x2.1} parent=0 // pred_fallthru
    _
  // Predicated region
  $region6: #{_pool2x2.1} parent=0 // pred_check
    _
  $region7: #{_pool2x2.1} parent=0 // pred_check_branch
    %10 = sbr.rel (0) target = $region9
  $region8: #{_pool2x2.1} parent=0 // pred_region
    _
  $region9: #{_pool2x2.1} parent=0 // pred_fallthru
    _
  %v11 = vld [vmem:[%s0] sm:$0xff]
  %v12 = vld [vmem:[%s0 + $0x8] sm:$0xff]
  %15 = vrot.lane.b32.xlu0 %v11, 112
  %v16 = vpop.permute.xlu0 %15
  %17 = vrot.lane.b32.xlu0 %v12, 112
  %v18 = vpop.permute.xlu0 %17
  %v19 = vrot.slane %v16, 4
  %v20 = vrot.slane %v18, 4
  %vm21 = vcmask 1043456
  %v22 = vsel %vm21, %v19, %v20
  %vm23 = vcmask 916480
  %v24 = vsel %vm23, %v16, %v22
  %v25 = vsel %vm23, %v18, %v20
  %v28 = vmax.f32 %v11, %v24
  %v29 = vmax.f32 %v12, %v25
  %32 = vrot.lane.b32.xlu0 %v28, 127
  %v33 = vpop.permute.xlu0 %32
  %34 = vrot.lane.b32.xlu0 %v29, 127
  %v35 = vpop.permute.xlu0 %34
  %v36 = vrot.slane %v33, 4
  %v37 = vrot.slane %v35, 4
  %v38 = vsel %vm21, %v36, %v37
  %vm39 = vcmask 1039360
  %v40 = vsel %vm39, %v33, %v38
  %v41 = vsel %vm39, %v35, %v37
  %v44 = vmax.f32 %v28, %v40
  %v45 = vmax.f32 %v29, %v41
  %v46 = vld [vmem:[%s1] sm:$0xff]
  %v47 = vld [vmem:[%s1 + $0x8] sm:$0xff]
  %v48 = vld [vmem:[%s1 + $0x10] sm:$0xff]
  %v49 = vld [vmem:[%s1 + $0x18] sm:$0xff]
  %v50 = vld [vmem:[%s1 + $0x20] sm:$0xff]
  %v51 = vld [vmem:[%s1 + $0x28] sm:$0xff]
  %v52 = vld [vmem:[%s1 + $0x30] sm:$0xff]
  %v53 = vld [vmem:[%s1 + $0x38] sm:$0xff]
  %v54 = vld [vmem:[%s1 + $0x40] sm:$0xff]
  %v55 = vld [vmem:[%s1 + $0x48] sm:$0xff]
  %v56 = vld [vmem:[%s1 + $0x50] sm:$0xff]
  %v57 = vld [vmem:[%s1 + $0x58] sm:$0xff]
  %v58 = vld [vmem:[%s1 + $0x60] sm:$0xff]
  %v59 = vld [vmem:[%s1 + $0x68] sm:$0xff]
  %v60 = vld [vmem:[%s1 + $0x70] sm:$0xff]
  %v61 = vld [vmem:[%s1 + $0x78] sm:$0xff]
  %v62 = vld [vmem:[%s1 + $0x80] sm:$0xff]
  %v63 = vld [vmem:[%s1 + $0x88] sm:$0xff]
  %v64 = vld [vmem:[%s1 + $0x90] sm:$0xff]
  %v65 = vld [vmem:[%s1 + $0x98] sm:$0xff]
  %v66 = vld [vmem:[%s1 + $0xa0] sm:$0xff]
  %v67 = vld [vmem:[%s1 + $0xa8] sm:$0xff]
  %v68 = vld [vmem:[%s1 + $0xb0] sm:$0xff]
  %v69 = vld [vmem:[%s1 + $0xb8] sm:$0xff]
  %v70 = vld [vmem:[%s1 + $0xc0] sm:$0xff]
  %v71 = vld [vmem:[%s1 + $0xc8] sm:$0xff]
  %v72 = vld [vmem:[%s1 + $0xd0] sm:$0xff]
  %v73 = vld [vmem:[%s1 + $0xd8] sm:$0xff]
  %v74 = vld [vmem:[%s1 + $0xe0] sm:$0xff]
  %v75 = vld [vmem:[%s1 + $0xe8] sm:$0xff]
  %v76 = vld [vmem:[%s1 + $0xf0] sm:$0xff]
  %v77 = vld [vmem:[%s1 + $0xf8] sm:$0xff]
  %v78 = vld [vmem:[%s1 + $0x100] sm:$0xff]
  %v79 = vld [vmem:[%s1 + $0x108] sm:$0xff]
  %v80 = vld [vmem:[%s1 + $0x110] sm:$0xff]
  %v81 = vld [vmem:[%s1 + $0x118] sm:$0xff]
  %v82 = vld [vmem:[%s1 + $0x120] sm:$0xff]
  %v83 = vld [vmem:[%s1 + $0x128] sm:$0xff]
  %v84 = vld [vmem:[%s1 + $0x130] sm:$0xff]
  %v85 = vld [vmem:[%s1 + $0x138] sm:$0xff]
  %v86 = vld [vmem:[%s1 + $0x140] sm:$0xff]
  %v87 = vld [vmem:[%s1 + $0x148] sm:$0xff]
  %v88 = vld [vmem:[%s1 + $0x150] sm:$0xff]
  %v89 = vld [vmem:[%s1 + $0x158] sm:$0xff]
  %v90 = vld [vmem:[%s1 + $0x160] sm:$0xff]
  %v91 = vld [vmem:[%s1 + $0x168] sm:$0xff]
  %v92 = vld [vmem:[%s1 + $0x170] sm:$0xff]
  %v93 = vld [vmem:[%s1 + $0x178] sm:$0xff]
  %v94 = vld [vmem:[%s1 + $0x180] sm:$0xff]
  %v95 = vld [vmem:[%s1 + $0x188] sm:$0xff]
  %v96 = vld [vmem:[%s1 + $0x190] sm:$0xff]
  %v97 = vld [vmem:[%s1 + $0x198] sm:$0xff]
  %v98 = vld [vmem:[%s1 + $0x1a0] sm:$0xff]
  %v99 = vld [vmem:[%s1 + $0x1a8] sm:$0xff]
  %v100 = vld [vmem:[%s1 + $0x1b0] sm:$0xff]
  %v101 = vld [vmem:[%s1 + $0x1b8] sm:$0xff]
  %v102 = vld [vmem:[%s1 + $0x1c0] sm:$0xff]
  %v103 = vld [vmem:[%s1 + $0x1c8] sm:$0xff]
  %v104 = vld [vmem:[%s1 + $0x1d0] sm:$0xff]
  %v105 = vld [vmem:[%s1 + $0x1d8] sm:$0xff]
  %v106 = vld [vmem:[%s1 + $0x1e0] sm:$0xff]
  %v107 = vld [vmem:[%s1 + $0x1e8] sm:$0x7f]
  %v110 = vcombine.high %v44, %v44
  %v111 = vcombine.high %v45, %v45
  %vm113 = vcmask 908288
  %v114 = vsel %vm113, %v111, 0
  %vm116 = vcmask 1046528
  %v118 = vsel %vm116, %v107, 0
  %120 = vmatprep.subr.mxu0 0.0
  %121 = vmatpush1.msra.mxu0 %v61
  %122 = vmatprep.subr.mxu0 0.0
  %123 = vmatpush1.msra.mxu0 %v60
  %124 = vmatprep.subr.mxu0 0.0
  %125 = vmatpush1.msra.mxu0 %v59
  %126 = vmatprep.subr.mxu0 0.0
  %127 = vmatpush1.msra.mxu0 %v58
  %128 = vmatprep.subr.mxu0 0.0
  %129 = vmatpush1.msra.mxu0 %v57
  %130 = vmatprep.subr.mxu0 0.0
  %131 = vmatpush1.msra.mxu0 %v56
  %132 = vmatprep.subr.mxu0 0.0
  %133 = vmatpush1.msra.mxu0 %v55
  %134 = vmatprep.subr.mxu0 0.0
  %135 = vmatpush1.msra.mxu0 %v54
  %136 = vmatprep.subr.mxu0 0.0
  %137 = vmatpush1.msra.mxu0 %v53
  %138 = vmatprep.subr.mxu0 0.0
  %139 = vmatpush1.msra.mxu0 %v52
  %140 = vmatprep.subr.mxu0 0.0
  %141 = vmatpush1.msra.mxu0 %v51
  %142 = vmatprep.subr.mxu0 0.0
  %143 = vmatpush1.msra.mxu0 %v50
  %144 = vmatprep.subr.mxu0 0.0
  %145 = vmatpush1.msra.mxu0 %v49
  %146 = vmatprep.subr.mxu0 0.0
  %147 = vmatpush1.msra.mxu0 %v48
  %148 = vmatprep.subr.mxu0 0.0
  %149 = vmatpush1.msra.mxu0 %v47
  %150 = vmatprep.subr.mxu0 0.0
  %151 = vmatpush1.msra.mxu0 %v46
  %152 = vmatprep.subr.mxu0 0.0
  %153 = vmatpush2.msra.mxu0 %v77
  %154 = vmatprep.subr.mxu0 0.0
  %155 = vmatpush2.msra.mxu0 %v76
  %156 = vmatprep.subr.mxu0 0.0
  %157 = vmatpush2.msra.mxu0 %v75
  %158 = vmatprep.subr.mxu0 0.0
  %159 = vmatpush2.msra.mxu0 %v74
  %160 = vmatprep.subr.mxu0 0.0
  %161 = vmatpush2.msra.mxu0 %v73
  %162 = vmatprep.subr.mxu0 0.0
  %163 = vmatpush2.msra.mxu0 %v72
  %164 = vmatprep.subr.mxu0 0.0
  %165 = vmatpush2.msra.mxu0 %v71
  %166 = vmatprep.subr.mxu0 0.0
  %167 = vmatpush2.msra.mxu0 %v70
  %168 = vmatprep.subr.mxu0 0.0
  %169 = vmatpush2.msra.mxu0 %v69
  %170 = vmatprep.subr.mxu0 0.0
  %171 = vmatpush2.msra.mxu0 %v68
  %172 = vmatprep.subr.mxu0 0.0
  %173 = vmatpush2.msra.mxu0 %v67
  %174 = vmatprep.subr.mxu0 0.0
  %175 = vmatpush2.msra.mxu0 %v66
  %176 = vmatprep.subr.mxu0 0.0
  %177 = vmatpush2.msra.mxu0 %v65
  %178 = vmatprep.subr.mxu0 0.0
  %179 = vmatpush2.msra.mxu0 %v64
  %180 = vmatprep.subr.mxu0 0.0
  %181 = vmatpush2.msra.mxu0 %v63
  %182 = vmatprep.subr.mxu0 0.0
  %183 = vmatpush2.msra.mxu0 %v62
  %184 = vmatprep.mubr.f32.mxu0 %v110
  %185 = vmatmul.mubr.f32.gmra.mxu0 %v44
  %v186 = vpop.f32.mrf.mxu0
  %v187 = vadd.f32 0.0, %v186
  %v188 = vpop.f32.mrf.mxu0
  %189 = vdwg.mxu0
  %190 = vmatprep.subr.mxu0 0.0
  %191 = vmatpush1.msra.mxu0 %v93
  %192 = vmatprep.subr.mxu0 0.0
  %193 = vmatpush1.msra.mxu0 %v92
  %194 = vmatprep.subr.mxu0 0.0
  %195 = vmatpush1.msra.mxu0 %v91
  %196 = vmatprep.subr.mxu0 0.0
  %197 = vmatpush1.msra.mxu0 %v90
  %198 = vmatprep.subr.mxu0 0.0
  %199 = vmatpush1.msra.mxu0 %v89
  %200 = vmatprep.subr.mxu0 0.0
  %201 = vmatpush1.msra.mxu0 %v88
  %202 = vmatprep.subr.mxu0 0.0
  %203 = vmatpush1.msra.mxu0 %v87
  %204 = vmatprep.subr.mxu0 0.0
  %205 = vmatpush1.msra.mxu0 %v86
  %206 = vmatprep.subr.mxu0 0.0
  %207 = vmatpush1.msra.mxu0 %v85
  %208 = vmatprep.subr.mxu0 0.0
  %209 = vmatpush1.msra.mxu0 %v84
  %210 = vmatprep.subr.mxu0 0.0
  %211 = vmatpush1.msra.mxu0 %v83
  %212 = vmatprep.subr.mxu0 0.0
  %213 = vmatpush1.msra.mxu0 %v82
  %214 = vmatprep.subr.mxu0 0.0
  %215 = vmatpush1.msra.mxu0 %v81
  %216 = vmatprep.subr.mxu0 0.0
  %217 = vmatpush1.msra.mxu0 %v80
  %218 = vmatprep.subr.mxu0 0.0
  %219 = vmatpush1.msra.mxu0 %v79
  %220 = vmatprep.subr.mxu0 0.0
  %221 = vmatpush1.msra.mxu0 %v78
  %222 = vmatprep.subr.mxu0 0.0
  %223 = vmatpush2.msra.mxu0 0.0
  %224 = vmatprep.subr.mxu0 0.0
  %225 = vmatpush2.msra.mxu0 0.0
  %226 = vmatprep.subr.mxu0 0.0
  %227 = vmatpush2.msra.mxu0 %v118
  %228 = vmatprep.subr.mxu0 0.0
  %229 = vmatpush2.msra.mxu0 %v106
  %230 = vmatprep.subr.mxu0 0.0
  %231 = vmatpush2.msra.mxu0 %v105
  %232 = vmatprep.subr.mxu0 0.0
  %233 = vmatpush2.msra.mxu0 %v104
  %234 = vmatprep.subr.mxu0 0.0
  %235 = vmatpush2.msra.mxu0 %v103
  %236 = vmatprep.subr.mxu0 0.0
  %237 = vmatpush2.msra.mxu0 %v102
  %238 = vmatprep.subr.mxu0 0.0
  %239 = vmatpush2.msra.mxu0 %v101
  %240 = vmatprep.subr.mxu0 0.0
  %241 = vmatpush2.msra.mxu0 %v100
  %242 = vmatprep.subr.mxu0 0.0
  %243 = vmatpush2.msra.mxu0 %v99
  %244 = vmatprep.subr.mxu0 0.0
  %245 = vmatpush2.msra.mxu0 %v98
  %246 = vmatprep.subr.mxu0 0.0
  %247 = vmatpush2.msra.mxu0 %v97
  %248 = vmatprep.subr.mxu0 0.0
  %249 = vmatpush2.msra.mxu0 %v96
  %250 = vmatprep.subr.mxu0 0.0
  %251 = vmatpush2.msra.mxu0 %v95
  %252 = vmatprep.subr.mxu0 0.0
  %253 = vmatpush2.msra.mxu0 %v94
  %254 = vmatprep.mubr.f32.mxu0 %v114
  %255 = vmatmul.mubr.f32.gmra.mxu0 %v45
  %v256 = vpop.f32.mrf.mxu0
  %v257 = vadd.f32 %v187, %v256
  %v258 = vpop.f32.mrf.mxu0
  %259 = vdwg.mxu0
  %260 = vst [vmem:[%s2] sm:$0xf] %v257
  // Predicated region
  $region10: #{_pool2x2.1} parent=0 // pred_check
    _
  $region11: #{_pool2x2.1} parent=0 // pred_check_branch
    %262 = sbr.rel (0) target = $region13
  $region12: #{_pool2x2.1} parent=0 // pred_region
    _
  $region13: #{_pool2x2.1} parent=0 // pred_fallthru
    _
  // Predicated region
  $region14: #{_pool2x2.1} parent=0 // pred_check
    _
  $region15: #{_pool2x2.1} parent=0 // pred_check_branch
    %264 = sbr.rel (0) target = $region17
  $region16: #{_pool2x2.1} parent=0 // pred_region
    _
  $region17: #{_pool2x2.1} parent=0 // pred_fallthru
    _

</llo_original>
